<compile_context>
chip_gen: v7x
topology: tpu7x:2x2x1
jax: 0.10.0
libtpu: 0.0.40
codegen_flags: <defaults>
</compile_context>

<pallas_src>
import functools

import numpy as np
import jax
import jax.numpy as jnp
from jax import lax
from jax.experimental import pallas as pl
from jax.experimental.pallas import tpu as pltpu

_PADR = 8  # interior row offset in padded scratch -> sublane-aligned stores


def _basic_block_kernel(*refs, H, W, Cin, P, Ho, Wo, stride, has_sc):
    """Entire BasicBlock for one batch element, fully fused in VMEM.

    Ref order: x, band1, b1, band2, b2, [bandsc, bsc], out, xpad, y1pad
      x_ref      : (1, H, W*Cin)           f32, spatial-packed NHWC
      band1_ref  : (3, W*Cin, Wo*P)        bf16 conv1 row-bands (BN1 folded)
      b1_ref     : (1, Wo*P)               f32 folded BN1 bias (tiled over Wo)
      band2_ref  : (3, Wo*P, Wo*P)         bf16 conv2 row-bands (BN2 folded)
      b2_ref     : (1, Wo*P)               f32
      bandsc_ref : (1, W*Cin, Wo*P)        bf16 1x1 shortcut band (BN folded)
      bsc_ref    : (1, Wo*P)               f32
      o_ref      : (1, Ho, Wo*P)
      xpad_ref   : VMEM (_PADR+H+1,  W*Cin) f32   row-padded input
      y1pad_ref  : VMEM (_PADR+Ho+1, Wo*P)  f32   row-padded conv1 output
    """
    refs = list(refs)
    x_ref = refs.pop(0)
    band1_ref = refs.pop(0)
    b1_ref = refs.pop(0)
    band2_ref = refs.pop(0)
    b2_ref = refs.pop(0)
    if has_sc:
        bandsc_ref = refs.pop(0)
        bsc_ref = refs.pop(0)
    o_ref = refs.pop(0)
    xpad_ref = refs.pop(0)
    y1pad_ref = refs.pop(0)

    f32, bf16 = jnp.float32, jnp.bfloat16
    WC, WP = W * Cin, Wo * P

    x2d = x_ref[0]                                            # (H, W*Cin) f32

    # ---- padded input: zero only the two halo rows the taps actually read ---
    # (re-zeroed every step, not pl.when(pid==0): the batch axis is "parallel"
    #  so on a megacore a core may never see program_id == 0.)
    xpad_ref[_PADR - 1:_PADR, :] = jnp.zeros((1, WC), f32)
    xpad_ref[_PADR + H:_PADR + H + 1, :] = jnp.zeros((1, WC), f32)
    xpad_ref[_PADR:_PADR + H, :] = x2d                        # aligned store

    def rows(ref, start):
        # Ho rows starting at `start`, stepping by the conv stride.
        if stride > 1:
            return ref[pl.ds(start, Ho, stride), :]
        return ref[start:start + Ho, :]

    # ---- conv1 (+ folded BN1): 3 row-band matmuls on the strided grid -------
    y1 = b1_ref[...]                                          # (1, Wo*P) f32
    for dy in range(3):
        lhs = rows(xpad_ref, _PADR - 1 + dy).astype(bf16)     # (Ho, W*Cin)
        y1 = y1 + jnp.dot(lhs, band1_ref[dy], preferred_element_type=f32)
    y1 = jnp.maximum(y1, 0.0)                                 # (Ho, Wo*P) f32

    # ---- padded conv1 output for conv2 (stride 1) ----------------------------
    y1pad_ref[_PADR - 1:_PADR, :] = jnp.zeros((1, WP), f32)
    y1pad_ref[_PADR + Ho:_PADR + Ho + 1, :] = jnp.zeros((1, WP), f32)
    y1pad_ref[_PADR:_PADR + Ho, :] = y1                       # aligned store

    # ---- conv2 (+ folded BN2): 3 row-band matmuls -----------------------------
    y2 = b2_ref[...]
    for dy in range(3):
        lhs = y1pad_ref[_PADR - 1 + dy:_PADR - 1 + dy + Ho, :].astype(bf16)
        y2 = y2 + jnp.dot(lhs, band2_ref[dy], preferred_element_type=f32)

    # ---- shortcut: identity (exact f32) or folded 1x1-conv band ---------------
    if has_sc:
        xs = rows(xpad_ref, _PADR).astype(bf16)               # (Ho, W*Cin)
        sc = jnp.dot(xs, bandsc_ref[0], preferred_element_type=f32) + bsc_ref[...]
    else:
        sc = x2d                                              # stride==1, Cin==P

    # ---- residual add + ReLU (f32 VPU) -> one lane-dense store ----------------
    o_ref[0] = jnp.maximum(y2 + sc, 0.0).astype(o_ref.dtype)


def _conv_row_band(w_hwio, w_in, w_out, stride):
    """Per-vertical-tap row-band matrices for a conv in the (row, W*C) layout.

    Returns band with shape (kh, w_in*Cin, w_out*Cout) such that
        band[ky, src*Cin + ci, ox*Cout + co] = w_hwio[ky, kx, ci, co]
    for src = ox*stride + kx - (kw-1)//2 within [0, w_in).  Out-of-range taps
    are absent, which implements the horizontal zero padding.
    """
    kh, kw, cin, cout = w_hwio.shape
    pad = (kw - 1) // 2
    ky, ox, kx, ci, co = np.meshgrid(
        np.arange(kh), np.arange(w_out), np.arange(kw),
        np.arange(cin), np.arange(cout), indexing='ij')
    src = ox * stride + kx - pad
    valid = (src >= 0) & (src < w_in)
    ky, ox, kx, ci, co, src = [a[valid] for a in (ky, ox, kx, ci, co, src)]
    vals = w_hwio[ky, kx, ci, co]
    band = jnp.zeros((kh, w_in * cin, w_out * cout), w_hwio.dtype)
    return band.at[ky, src * cin + ci, ox * cout + co].set(vals)


def basic_block_forward(x_nchw, params, stride):
    """Pallas implementation of BasicBlock.forward (NCHW in, NCHW out)."""
    N, Cin, H, W = x_nchw.shape
    P = params['w1'].shape[-1]
    Ho = (H - 1) // stride + 1
    Wo = (W - 1) // stride + 1
    has_sc = 'w_sc' in params
    if not has_sc:
        assert stride == 1 and Cin == P, \
            "identity shortcut requires stride==1 and in_planes==planes"

    # Spatial-packed layout: (N, H, W*Cin) -> W and C share the lane dimension.
    x2d = jnp.transpose(x_nchw, (0, 2, 3, 1)).reshape(N, H, W * Cin)
    x2d = x2d.astype(jnp.float32)

    # Fold eval-mode BN scale into the conv weights and build the row-band
    # matrices once on the host/XLA side (pure weight preprocessing).
    bf16 = jnp.bfloat16
    band1 = _conv_row_band(params['w1'] * params['scale1'], W, Wo, stride).astype(bf16)
    band2 = _conv_row_band(params['w2'] * params['scale2'], Wo, Wo, 1).astype(bf16)
    b1 = jnp.tile(params['bias1'], Wo).reshape(1, Wo * P).astype(jnp.float32)
    b2 = jnp.tile(params['bias2'], Wo).reshape(1, Wo * P).astype(jnp.float32)

    args = [x2d, band1, b1, band2, b2]
    in_specs = [
        pl.BlockSpec((1, H, W * Cin), lambda n: (n, 0, 0)),
        pl.BlockSpec((3, W * Cin, Wo * P), lambda n: (0, 0, 0)),
        pl.BlockSpec((1, Wo * P), lambda n: (0, 0)),
        pl.BlockSpec((3, Wo * P, Wo * P), lambda n: (0, 0, 0)),
        pl.BlockSpec((1, Wo * P), lambda n: (0, 0)),
    ]
    if has_sc:
        bandsc = _conv_row_band(params['w_sc'] * params['scale_sc'],
                                W, Wo, stride).astype(bf16)
        bsc = jnp.tile(params['bias_sc'], Wo).reshape(1, Wo * P).astype(jnp.float32)
        args += [bandsc, bsc]
        in_specs += [pl.BlockSpec((1, W * Cin, Wo * P), lambda n: (0, 0, 0)),
                     pl.BlockSpec((1, Wo * P), lambda n: (0, 0))]

    kernel = functools.partial(_basic_block_kernel, H=H, W=W, Cin=Cin, P=P,
                               Ho=Ho, Wo=Wo, stride=stride, has_sc=has_sc)

    out = pl.pallas_call(
        kernel,
        out_shape=jax.ShapeDtypeStruct((N, Ho, Wo * P), x2d.dtype),
        grid_spec=pltpu.PrefetchScalarGridSpec(
            num_scalar_prefetch=0,
            grid=(N,),
            in_specs=in_specs,
            out_specs=pl.BlockSpec((1, Ho, Wo * P), lambda n: (n, 0, 0)),
            scratch_shapes=[
                pltpu.VMEM((_PADR + H + 1, W * Cin), jnp.float32),
                pltpu.VMEM((_PADR + Ho + 1, Wo * P), jnp.float32),
            ]),
        compiler_params=pltpu.CompilerParams(
            dimension_semantics=("parallel",)),
    )(*args)

    out = out.reshape(N, Ho, Wo, P)                 # free metadata reshape
    return jnp.transpose(out, (0, 3, 1, 2))         # -> NCHW


def init_params(key, in_planes, planes, stride, eps=1e-5):
    keys = jax.random.split(key, 12)

    def bn_fold(kg, kb, km, kv, C):
        gamma = 1.0 + 0.1 * jax.random.normal(kg, (C,), jnp.float32)
        beta = 0.1 * jax.random.normal(kb, (C,), jnp.float32)
        mean = 0.1 * jax.random.normal(km, (C,), jnp.float32)
        var = jax.random.uniform(kv, (C,), jnp.float32, 0.5, 1.5)
        scale = gamma / jnp.sqrt(var + eps)
        bias = beta - mean * scale
        return scale, bias

    # PyTorch conv weight layout (Cout, Cin, kh, kw) -> HWIO.
    w1_t = 0.1 * jax.random.normal(keys[0], (planes, in_planes, 3, 3), jnp.float32)
    w2_t = 0.1 * jax.random.normal(keys[1], (planes, planes, 3, 3), jnp.float32)
    params = {
        'w1': jnp.transpose(w1_t, (2, 3, 1, 0)),
        'w2': jnp.transpose(w2_t, (2, 3, 1, 0)),
    }
    params['scale1'], params['bias1'] = bn_fold(keys[2], keys[3], keys[4], keys[5], planes)
    params['scale2'], params['bias2'] = bn_fold(keys[6], keys[7], keys[8], keys[9], planes)

    if stride != 1 or in_planes != planes:
        wsc_t = 0.1 * jax.random.normal(keys[10], (planes, in_planes, 1, 1), jnp.float32)
        params['w_sc'] = jnp.transpose(wsc_t, (2, 3, 1, 0))
        params['scale_sc'], params['bias_sc'] = bn_fold(
            *jax.random.split(keys[11], 4), planes)
    return params


def ref_forward(x_nchw, params, stride):
    """Pure-JAX reference: exact module math in f32 (HIGHEST precision)."""
    x = jnp.transpose(x_nchw, (0, 2, 3, 1))
    dn = ('NHWC', 'HWIO', 'NHWC')
    hi = jax.lax.Precision.HIGHEST

    def conv3(inp, w, s):
        return lax.conv_general_dilated(inp, w, (s, s), ((1, 1), (1, 1)),
                                        dimension_numbers=dn, precision=hi)

    y = conv3(x, params['w1'], stride) * params['scale1'] + params['bias1']
    y = jnp.maximum(y, 0.0)
    y = conv3(y, params['w2'], 1) * params['scale2'] + params['bias2']
    if 'w_sc' in params:
        sc = lax.conv_general_dilated(x, params['w_sc'], (stride, stride),
                                      ((0, 0), (0, 0)), dimension_numbers=dn,
                                      precision=hi)
        sc = sc * params['scale_sc'] + params['bias_sc']
    else:
        sc = x
    out = jnp.maximum(y + sc, 0.0)
    return jnp.transpose(out, (0, 3, 1, 2))


def ref_forward_matched(x_nchw, params, stride):
    """Reference with the kernel's MXU precision: folded BN, bf16 conv operands,
    f32 accumulation and f32 elementwise epilogue."""
    x = jnp.transpose(x_nchw, (0, 2, 3, 1))
    dn = ('NHWC', 'HWIO', 'NHWC')
    bf16, f32 = jnp.bfloat16, jnp.float32

    def conv(inp, w, s, pad):
        return lax.conv_general_dilated(inp.astype(bf16), w.astype(bf16), (s, s),
                                        ((pad, pad), (pad, pad)),
                                        dimension_numbers=dn,
                                        preferred_element_type=f32)

    w1 = params['w1'] * params['scale1']
    w2 = params['w2'] * params['scale2']
    y = conv(x, w1, stride, 1) + params['bias1']
    y = jnp.maximum(y, 0.0)
    y = conv(y, w2, 1, 1) + params['bias2']
    if 'w_sc' in params:
        wsc = params['w_sc'] * params['scale_sc']
        sc = conv(x, wsc, stride, 0) + params['bias_sc']
    else:
        sc = x
    out = jnp.maximum(y + sc, 0.0)
    return jnp.transpose(out, (0, 3, 1, 2))


if __name__ == "__main__":
    key = jax.random.PRNGKey(0)

    # Config 1: downsampling block (in_planes=4, planes=8, stride=2, 1x1 shortcut).
    kx, kp, kx2, kp2 = jax.random.split(key, 4)
    N, Cin, H, W = 2, 4, 16, 16
    planes, stride = 8, 2

    x = jax.random.normal(kx, (N, Cin, H, W), jnp.float32)
    params = init_params(kp, Cin, planes, stride)

    out = jax.block_until_ready(basic_block_forward(x, params, stride))
    assert out.shape == (N, planes, (H - 1) // stride + 1, (W - 1) // stride + 1)
    # Tight check vs. a reference using the same (bf16 MXU, f32 accum) precision.
    np.testing.assert_allclose(np.asarray(out),
                               np.asarray(ref_forward_matched(x, params, stride)),
                               rtol=1e-2, atol=1e-2)
    # Loose sanity bound vs. the exact f32 module math (bf16 MXU rounding).
    np.testing.assert_allclose(np.asarray(out),
                               np.asarray(ref_forward(x, params, stride)),
                               rtol=1e-1, atol=1e-1)

    # Config 2: identity-shortcut block (stride=1, in_planes == planes).
    x2 = jax.random.normal(kx2, (N, planes, H, W), jnp.float32)
    params2 = init_params(kp2, planes, planes, 1)
    out2 = jax.block_until_ready(basic_block_forward(x2, params2, 1))
    np.testing.assert_allclose(np.asarray(out2),
                               np.asarray(ref_forward_matched(x2, params2, 1)),
                               rtol=1e-2, atol=1e-2)
    np.testing.assert_allclose(np.asarray(out2),
                               np.asarray(ref_forward(x2, params2, 1)),
                               rtol=1e-1, atol=1e-1)

    print("KERNEL_OK")
</pallas_src>

<mosaic_0001>
module attributes {stable_mosaic.version = 11 : i64} {
  func.func @_basic_block_kernel(%arg0: i32, %arg1: memref<1x16x64xf32, #tpu.memory_space<vmem>>, %arg2: memref<3x64x64xbf16, #tpu.memory_space<vmem>>, %arg3: memref<1x64xf32, #tpu.memory_space<vmem>>, %arg4: memref<3x64x64xbf16, #tpu.memory_space<vmem>>, %arg5: memref<1x64xf32, #tpu.memory_space<vmem>>, %arg6: memref<1x64x64xbf16, #tpu.memory_space<vmem>>, %arg7: memref<1x64xf32, #tpu.memory_space<vmem>>, %arg8: memref<1x8x64xf32, #tpu.memory_space<vmem>>, %arg9: memref<25x64xf32, #tpu.memory_space<vmem>>, %arg10: memref<17x64xf32, #tpu.memory_space<vmem>>) attributes {dimension_semantics = [#tpu.dimension_semantics<parallel>], iteration_bounds = array<i64: 2>, scalar_prefetch = 0 : i64, scratch_operands = 2 : i64, tpu.core_type = #tpu.core_type<tc>, window_params = [{transform_indices = @transform_0, window_bounds = array<i64: 1, 16, 64>}, {pipeline_mode = #tpu.pipeline_mode<synchronous>, transform_indices = @transform_1, window_bounds = array<i64: 3, 64, 64>}, {pipeline_mode = #tpu.pipeline_mode<synchronous>, transform_indices = @transform_2, window_bounds = array<i64: 1, 64>}, {pipeline_mode = #tpu.pipeline_mode<synchronous>, transform_indices = @transform_3, window_bounds = array<i64: 3, 64, 64>}, {pipeline_mode = #tpu.pipeline_mode<synchronous>, transform_indices = @transform_4, window_bounds = array<i64: 1, 64>}, {pipeline_mode = #tpu.pipeline_mode<synchronous>, transform_indices = @transform_5, window_bounds = array<i64: 1, 64, 64>}, {pipeline_mode = #tpu.pipeline_mode<synchronous>, transform_indices = @transform_6, window_bounds = array<i64: 1, 64>}, {transform_indices = @transform_7, window_bounds = array<i64: 1, 8, 64>}]} {
    %c0 = arith.constant 0 : index
    %c0_0 = arith.constant 0 : index
    %c0_1 = arith.constant 0 : index
    %0 = vector.load %arg1[%c0, %c0_0, %c0_1] : memref<1x16x64xf32, #tpu.memory_space<vmem>>, vector<1x16x64xf32>
    %1 = vector.shape_cast %0 : vector<1x16x64xf32> to vector<16x64xf32>
    %cst = arith.constant 0.000000e+00 : f32
    %2 = vector.broadcast %cst : f32 to vector<1x64xf32>
    %c7 = arith.constant 7 : index
    %c0_2 = arith.constant 0 : index
    %3 = vector.load %arg9[%c7, %c0_2] : memref<25x64xf32, #tpu.memory_space<vmem>>, vector<1x64xf32>
    tpu.vector_store %arg9[%c7, %c0_2], %2 {strides = array<i32>} : memref<25x64xf32, #tpu.memory_space<vmem>>, vector<1x64xf32>,
    %cst_3 = arith.constant 0.000000e+00 : f32
    %4 = vector.broadcast %cst_3 : f32 to vector<1x64xf32>
    %c24 = arith.constant 24 : index
    %c0_4 = arith.constant 0 : index
    %5 = vector.load %arg9[%c24, %c0_4] : memref<25x64xf32, #tpu.memory_space<vmem>>, vector<1x64xf32>
    tpu.vector_store %arg9[%c24, %c0_4], %4 {strides = array<i32>} : memref<25x64xf32, #tpu.memory_space<vmem>>, vector<1x64xf32>,
    %c8 = arith.constant 8 : index
    %c0_5 = arith.constant 0 : index
    %6 = vector.load %arg9[%c8, %c0_5] : memref<25x64xf32, #tpu.memory_space<vmem>>, vector<16x64xf32>
    tpu.vector_store %arg9[%c8, %c0_5], %1 {strides = array<i32>} : memref<25x64xf32, #tpu.memory_space<vmem>>, vector<16x64xf32>,
    %c0_6 = arith.constant 0 : index
    %c0_7 = arith.constant 0 : index
    %7 = vector.load %arg3[%c0_6, %c0_7] : memref<1x64xf32, #tpu.memory_space<vmem>>, vector<1x64xf32>
    %c7_8 = arith.constant 7 : index
    %c0_9 = arith.constant 0 : index
    %8 = tpu.strided_load %arg9[%c7_8, %c0_9] {strides = array<i32: 2, 1>} : memref<25x64xf32, #tpu.memory_space<vmem>>, vector<8x64xf32>
    %9 = arith.truncf %8 : vector<8x64xf32> to vector<8x64xbf16>
    %c0_10 = arith.constant 0 : index
    %c0_11 = arith.constant 0 : index
    %c0_12 = arith.constant 0 : index
    %10 = vector.load %arg2[%c0_10, %c0_11, %c0_12] : memref<3x64x64xbf16, #tpu.memory_space<vmem>>, vector<1x64x64xbf16>
    %11 = vector.shape_cast %10 : vector<1x64x64xbf16> to vector<64x64xbf16>
    %cst_13 = arith.constant dense<0.000000e+00> : vector<8x64xf32>
    %12 = tpu.matmul %9, %11, %cst_13 {dimension_numbers = #tpu.dot_dimension_numbers<[1], [0], [0], [1], [0, 0, 1, 1], [], []>} : vector<8x64xbf16>, vector<64x64xbf16>, vector<8x64xf32> -> vector<8x64xf32>
    %13 = vector.broadcast %7 : vector<1x64xf32> to vector<8x64xf32>
    %14 = arith.addf %13, %12 : vector<8x64xf32>
    %c8_14 = arith.constant 8 : index
    %c0_15 = arith.constant 0 : index
    %15 = tpu.strided_load %arg9[%c8_14, %c0_15] {strides = array<i32: 2, 1>} : memref<25x64xf32, #tpu.memory_space<vmem>>, vector<8x64xf32>
    %16 = arith.truncf %15 : vector<8x64xf32> to vector<8x64xbf16>
    %c1 = arith.constant 1 : index
    %c0_16 = arith.constant 0 : index
    %c0_17 = arith.constant 0 : index
    %17 = vector.load %arg2[%c1, %c0_16, %c0_17] : memref<3x64x64xbf16, #tpu.memory_space<vmem>>, vector<1x64x64xbf16>
    %18 = vector.shape_cast %17 : vector<1x64x64xbf16> to vector<64x64xbf16>
    %cst_18 = arith.constant dense<0.000000e+00> : vector<8x64xf32>
    %19 = tpu.matmul %16, %18, %cst_18 {dimension_numbers = #tpu.dot_dimension_numbers<[1], [0], [0], [1], [0, 0, 1, 1], [], []>} : vector<8x64xbf16>, vector<64x64xbf16>, vector<8x64xf32> -> vector<8x64xf32>
    %20 = arith.addf %14, %19 : vector<8x64xf32>
    %c9 = arith.constant 9 : index
    %c0_19 = arith.constant 0 : index
    %21 = tpu.strided_load %arg9[%c9, %c0_19] {strides = array<i32: 2, 1>} : memref<25x64xf32, #tpu.memory_space<vmem>>, vector<8x64xf32>
    %22 = arith.truncf %21 : vector<8x64xf32> to vector<8x64xbf16>
    %c2 = arith.constant 2 : index
    %c0_20 = arith.constant 0 : index
    %c0_21 = arith.constant 0 : index
    %23 = vector.load %arg2[%c2, %c0_20, %c0_21] : memref<3x64x64xbf16, #tpu.memory_space<vmem>>, vector<1x64x64xbf16>
    %24 = vector.shape_cast %23 : vector<1x64x64xbf16> to vector<64x64xbf16>
    %cst_22 = arith.constant dense<0.000000e+00> : vector<8x64xf32>
    %25 = tpu.matmul %22, %24, %cst_22 {dimension_numbers = #tpu.dot_dimension_numbers<[1], [0], [0], [1], [0, 0, 1, 1], [], []>} : vector<8x64xbf16>, vector<64x64xbf16>, vector<8x64xf32> -> vector<8x64xf32>
    %26 = arith.addf %20, %25 : vector<8x64xf32>
    %cst_23 = arith.constant 0.000000e+00 : f32
    %27 = vector.broadcast %cst_23 : f32 to vector<8x64xf32>
    %28 = arith.maximumf %26, %27 : vector<8x64xf32>
    %cst_24 = arith.constant 0.000000e+00 : f32
    %29 = vector.broadcast %cst_24 : f32 to vector<1x64xf32>
    %c7_25 = arith.constant 7 : index
    %c0_26 = arith.constant 0 : index
    %30 = vector.load %arg10[%c7_25, %c0_26] : memref<17x64xf32, #tpu.memory_space<vmem>>, vector<1x64xf32>
    tpu.vector_store %arg10[%c7_25, %c0_26], %29 {strides = array<i32>} : memref<17x64xf32, #tpu.memory_space<vmem>>, vector<1x64xf32>,
    %cst_27 = arith.constant 0.000000e+00 : f32
    %31 = vector.broadcast %cst_27 : f32 to vector<1x64xf32>
    %c16 = arith.constant 16 : index
    %c0_28 = arith.constant 0 : index
    %32 = vector.load %arg10[%c16, %c0_28] : memref<17x64xf32, #tpu.memory_space<vmem>>, vector<1x64xf32>
    tpu.vector_store %arg10[%c16, %c0_28], %31 {strides = array<i32>} : memref<17x64xf32, #tpu.memory_space<vmem>>, vector<1x64xf32>,
    %c8_29 = arith.constant 8 : index
    %c0_30 = arith.constant 0 : index
    %33 = vector.load %arg10[%c8_29, %c0_30] : memref<17x64xf32, #tpu.memory_space<vmem>>, vector<8x64xf32>
    tpu.vector_store %arg10[%c8_29, %c0_30], %28 {strides = array<i32>} : memref<17x64xf32, #tpu.memory_space<vmem>>, vector<8x64xf32>,
    %c0_31 = arith.constant 0 : index
    %c0_32 = arith.constant 0 : index
    %34 = vector.load %arg5[%c0_31, %c0_32] : memref<1x64xf32, #tpu.memory_space<vmem>>, vector<1x64xf32>
    %c7_33 = arith.constant 7 : index
    %c0_34 = arith.constant 0 : index
    %35 = vector.load %arg10[%c7_33, %c0_34] : memref<17x64xf32, #tpu.memory_space<vmem>>, vector<8x64xf32>
    %36 = arith.truncf %35 : vector<8x64xf32> to vector<8x64xbf16>
    %c0_35 = arith.constant 0 : index
    %c0_36 = arith.constant 0 : index
    %c0_37 = arith.constant 0 : index
    %37 = vector.load %arg4[%c0_35, %c0_36, %c0_37] : memref<3x64x64xbf16, #tpu.memory_space<vmem>>, vector<1x64x64xbf16>
    %38 = vector.shape_cast %37 : vector<1x64x64xbf16> to vector<64x64xbf16>
    %cst_38 = arith.constant dense<0.000000e+00> : vector<8x64xf32>
    %39 = tpu.matmul %36, %38, %cst_38 {dimension_numbers = #tpu.dot_dimension_numbers<[1], [0], [0], [1], [0, 0, 1, 1], [], []>} : vector<8x64xbf16>, vector<64x64xbf16>, vector<8x64xf32> -> vector<8x64xf32>
    %40 = vector.broadcast %34 : vector<1x64xf32> to vector<8x64xf32>
    %41 = arith.addf %40, %39 : vector<8x64xf32>
    %c8_39 = arith.constant 8 : index
    %c0_40 = arith.constant 0 : index
    %42 = vector.load %arg10[%c8_39, %c0_40] : memref<17x64xf32, #tpu.memory_space<vmem>>, vector<8x64xf32>
    %43 = arith.truncf %42 : vector<8x64xf32> to vector<8x64xbf16>
    %c1_41 = arith.constant 1 : index
    %c0_42 = arith.constant 0 : index
    %c0_43 = arith.constant 0 : index
    %44 = vector.load %arg4[%c1_41, %c0_42, %c0_43] : memref<3x64x64xbf16, #tpu.memory_space<vmem>>, vector<1x64x64xbf16>
    %45 = vector.shape_cast %44 : vector<1x64x64xbf16> to vector<64x64xbf16>
    %cst_44 = arith.constant dense<0.000000e+00> : vector<8x64xf32>
    %46 = tpu.matmul %43, %45, %cst_44 {dimension_numbers = #tpu.dot_dimension_numbers<[1], [0], [0], [1], [0, 0, 1, 1], [], []>} : vector<8x64xbf16>, vector<64x64xbf16>, vector<8x64xf32> -> vector<8x64xf32>
    %47 = arith.addf %41, %46 : vector<8x64xf32>
    %c9_45 = arith.constant 9 : index
    %c0_46 = arith.constant 0 : index
    %48 = vector.load %arg10[%c9_45, %c0_46] : memref<17x64xf32, #tpu.memory_space<vmem>>, vector<8x64xf32>
    %49 = arith.truncf %48 : vector<8x64xf32> to vector<8x64xbf16>
    %c2_47 = arith.constant 2 : index
    %c0_48 = arith.constant 0 : index
    %c0_49 = arith.constant 0 : index
    %50 = vector.load %arg4[%c2_47, %c0_48, %c0_49] : memref<3x64x64xbf16, #tpu.memory_space<vmem>>, vector<1x64x64xbf16>
    %51 = vector.shape_cast %50 : vector<1x64x64xbf16> to vector<64x64xbf16>
    %cst_50 = arith.constant dense<0.000000e+00> : vector<8x64xf32>
    %52 = tpu.matmul %49, %51, %cst_50 {dimension_numbers = #tpu.dot_dimension_numbers<[1], [0], [0], [1], [0, 0, 1, 1], [], []>} : vector<8x64xbf16>, vector<64x64xbf16>, vector<8x64xf32> -> vector<8x64xf32>
    %53 = arith.addf %47, %52 : vector<8x64xf32>
    %c8_51 = arith.constant 8 : index
    %c0_52 = arith.constant 0 : index
    %54 = tpu.strided_load %arg9[%c8_51, %c0_52] {strides = array<i32: 2, 1>} : memref<25x64xf32, #tpu.memory_space<vmem>>, vector<8x64xf32>
    %55 = arith.truncf %54 : vector<8x64xf32> to vector<8x64xbf16>
    %c0_53 = arith.constant 0 : index
    %c0_54 = arith.constant 0 : index
    %c0_55 = arith.constant 0 : index
    %56 = vector.load %arg6[%c0_53, %c0_54, %c0_55] : memref<1x64x64xbf16, #tpu.memory_space<vmem>>, vector<1x64x64xbf16>
    %57 = vector.shape_cast %56 : vector<1x64x64xbf16> to vector<64x64xbf16>
    %cst_56 = arith.constant dense<0.000000e+00> : vector<8x64xf32>
    %58 = tpu.matmul %55, %57, %cst_56 {dimension_numbers = #tpu.dot_dimension_numbers<[1], [0], [0], [1], [0, 0, 1, 1], [], []>} : vector<8x64xbf16>, vector<64x64xbf16>, vector<8x64xf32> -> vector<8x64xf32>
    %c0_57 = arith.constant 0 : index
    %c0_58 = arith.constant 0 : index
    %59 = vector.load %arg7[%c0_57, %c0_58] : memref<1x64xf32, #tpu.memory_space<vmem>>, vector<1x64xf32>
    %60 = vector.broadcast %59 : vector<1x64xf32> to vector<8x64xf32>
    %61 = arith.addf %58, %60 : vector<8x64xf32>
    %62 = arith.addf %53, %61 : vector<8x64xf32>
    %cst_59 = arith.constant 0.000000e+00 : f32
    %63 = vector.broadcast %cst_59 : f32 to vector<8x64xf32>
    %64 = arith.maximumf %62, %63 : vector<8x64xf32>
    %c0_60 = arith.constant 0 : index
    %c0_61 = arith.constant 0 : index
    %c0_62 = arith.constant 0 : index
    %65 = vector.load %arg8[%c0_60, %c0_61, %c0_62] : memref<1x8x64xf32, #tpu.memory_space<vmem>>, vector<1x8x64xf32>
    %66 = vector.shape_cast %65 : vector<1x8x64xf32> to vector<8x64xf32>
    %67 = vector.shape_cast %64 : vector<8x64xf32> to vector<1x8x64xf32>
    tpu.vector_store %arg8[%c0_60, %c0_61, %c0_62], %67 {strides = array<i32>} : memref<1x8x64xf32, #tpu.memory_space<vmem>>, vector<1x8x64xf32>,
    return
  }
  func.func @transform_0(%arg0: i32) -> (i32, i32, i32) {
    %c0_i32 = arith.constant 0 : i32
    %c0_i32_0 = arith.constant 0 : i32
    %c0_i32_1 = arith.constant 0 : i32
    return %arg0, %c0_i32, %c0_i32_0 : i32, i32, i32
  }
  func.func @transform_1(%arg0: i32) -> (i32, i32, i32) {
    %c0_i32 = arith.constant 0 : i32
    %c0_i32_0 = arith.constant 0 : i32
    %c0_i32_1 = arith.constant 0 : i32
    %c0_i32_2 = arith.constant 0 : i32
    return %c0_i32, %c0_i32_0, %c0_i32_1 : i32, i32, i32
  }
  func.func @transform_2(%arg0: i32) -> (i32, i32) {
    %c0_i32 = arith.constant 0 : i32
    %c0_i32_0 = arith.constant 0 : i32
    %c0_i32_1 = arith.constant 0 : i32
    return %c0_i32, %c0_i32_0 : i32, i32
  }
  func.func @transform_3(%arg0: i32) -> (i32, i32, i32) {
    %c0_i32 = arith.constant 0 : i32
    %c0_i32_0 = arith.constant 0 : i32
    %c0_i32_1 = arith.constant 0 : i32
    %c0_i32_2 = arith.constant 0 : i32
    return %c0_i32, %c0_i32_0, %c0_i32_1 : i32, i32, i32
  }
  func.func @transform_4(%arg0: i32) -> (i32, i32) {
    %c0_i32 = arith.constant 0 : i32
    %c0_i32_0 = arith.constant 0 : i32
    %c0_i32_1 = arith.constant 0 : i32
    return %c0_i32, %c0_i32_0 : i32, i32
  }
  func.func @transform_5(%arg0: i32) -> (i32, i32, i32) {
    %c0_i32 = arith.constant 0 : i32
    %c0_i32_0 = arith.constant 0 : i32
    %c0_i32_1 = arith.constant 0 : i32
    %c0_i32_2 = arith.constant 0 : i32
    return %c0_i32, %c0_i32_0, %c0_i32_1 : i32, i32, i32
  }
  func.func @transform_6(%arg0: i32) -> (i32, i32) {
    %c0_i32 = arith.constant 0 : i32
    %c0_i32_0 = arith.constant 0 : i32
    %c0_i32_1 = arith.constant 0 : i32
    return %c0_i32, %c0_i32_0 : i32, i32
  }
  func.func @transform_7(%arg0: i32) -> (i32, i32, i32) {
    %c0_i32 = arith.constant 0 : i32
    %c0_i32_0 = arith.constant 0 : i32
    %c0_i32_1 = arith.constant 0 : i32
    return %arg0, %c0_i32, %c0_i32_0 : i32, i32, i32
  }
}

</mosaic_0001>

<llo_original>
// kernel: tpu_custom_call.1
$region0: #{tpu_custom_call.1}
  #allocation0 [shape = 'u32[]', space=smem, size = 0x4, offset = 0x4, fixed_abs, tag = 'smem constant byte address 0x4 - core index']
  #allocation1 [shape = 'u32[144,128]{1,0:T(1,128)}', space=vmem, size = 0x12000, scoped, tag = 'internal scratch']
  #allocation2 [shape = 'f32[25,64]{1,0:T(8,128)}', space=vmem, size = 0x4000, scoped, tag = 'scratch operand']
  #allocation3 [shape = 'f32[17,64]{1,0:T(8,128)}', space=vmem, size = 0x3000, scoped, tag = 'scratch operand']
  %s0 = inlined_call_operand.hbm [shape: f32[2,16,64], index: 0, kind: input, shape index: {}]
  %s1 = inlined_call_operand.hbm [shape: bf16[3,64,64], index: 1, kind: input, shape index: {}]
  %s2 = inlined_call_operand.vmem [shape: f32[1,64], index: 2, kind: input, shape index: {}]
  %s3 = inlined_call_operand.hbm [shape: bf16[3,64,64], index: 3, kind: input, shape index: {}]
  %s4 = inlined_call_operand.vmem [shape: f32[1,64], index: 4, kind: input, shape index: {}]
  %s5 = inlined_call_operand.hbm [shape: bf16[1,64,64], index: 5, kind: input, shape index: {}]
  %s6 = inlined_call_operand.vmem [shape: f32[1,64], index: 6, kind: input, shape index: {}]
  %s7 = inlined_call_operand.hbm [shape: f32[2,8,64], index: 7, kind: output, shape index: {}]
  %s8 = sld [smem:[#allocation0]]
  $region77: #{tpu_custom_call.1} parent=0
    _
  %s10 = ssub.s32 1, %s8
  %s11 = scalar_select 0, %s10, %s8
  $region1: #{tpu_custom_call.1} parent=0
    #allocation4 [shape = 'u8[16384]{0}', space=vmem, size = 0x4000, scoped, tag = 'input window, operand 0']
    #allocation5 [shape = 's32[2]{0}', space=sflag, size = 0x8, scoped, tag = 'scoped memory for tpu_custom_call.1']
    #allocation6 [shape = 's32[2]{0}', space=sflag, size = 0x8, scoped, tag = 'scoped memory for tpu_custom_call.1']
    #allocation7 [shape = 'u8[49152]{0}', space=vmem, size = 0xc000, scoped, tag = 'input window, operand 1, single buffered']
    #allocation8 [shape = 's32[1]{0}', space=sflag, size = 0x4, scoped, tag = 'scoped memory for tpu_custom_call.1']
    #allocation9 [shape = 'u8[49152]{0}', space=vmem, size = 0xc000, scoped, tag = 'input window, operand 3, single buffered']
    #allocation10 [shape = 'u8[16384]{0}', space=vmem, size = 0x4000, scoped, tag = 'input window, operand 5, single buffered']
    #allocation11 [shape = 's32[1]{0}', space=sflag, size = 0x4, scoped, tag = 'scoped memory for tpu_custom_call.1']
    #allocation12 [shape = 'u8[8192]{0}', space=vmem, size = 0x2000, scoped, tag = 'output window, operand 0']
    %12 = vsyncpa [#allocation5], 0
    %s13 = scalar_lea.sflag [#allocation5], 1
    %14 = vsyncpa %s13, 0
    %15 = vsyncpa [#allocation8], 0
    %16 = vsyncpa [#allocation11], 0
    %17 = vsyncpa [#allocation6], 0
    %s18 = scalar_lea.sflag [#allocation6], 1
    %19 = vsyncpa %s18, 0
    loop: start=0, step=1, limit=4
    $region2: #{tpu_custom_call.1} parent=1 // loop_pre_header
      _
    $region3: #{tpu_custom_call.1} parent=1 // loop_header
      %s21 = sphi 0, %s25
      %p22 = scmp.ge.s32.totalorder %s21, 4
      %s31 = sphi 0, %s33
      %s34 = sphi 0, %s31
      %s35 = sphi 0, %s34
      %s51 = sphi 0, %s35
      %s55 = sphi 0, %s55
      %s57 = sphi 0, %s55
      %s58 = sphi 0, %s57
      %s72 = sphi 0, %s58
      %s76 = sphi 0, %s76
      %s78 = sphi 0, %s76
      %s79 = sphi 0, %s78
      %s93 = sphi 0, %s79
      %s97 = sphi 0, %s97
      %s99 = sphi 0, %s97
      %s100 = sphi 0, %s99
      %s114 = sphi 0, %s100
      %s118 = sphi 0, %s118
      %s120 = sphi 0, %s118
      %s121 = sphi 0, %s120
      %s135 = sphi 0, %s121
      %s139 = sphi 0, %s139
      %s141 = sphi 0, %s139
      %s142 = sphi 0, %s141
      %s156 = sphi 0, %s142
      %s160 = sphi 0, %s160
      %s162 = sphi 0, %s160
      %s163 = sphi 0, %s162
      %s177 = sphi 0, %s163
      %s183 = sphi 0, %s185
      %s186 = sphi 0, %s183
      %s187 = sphi 0, %s186
      %s203 = sphi 0, %s187
    $region4: #{tpu_custom_call.1} parent=1 // loop_header_branch
      %24 = sbr.rel (%p22) target = $region8
    $region5: #{tpu_custom_call.1} parent=1 // loop_body
      %s26 = ssub.s32 %s21, 1
      %s27 = ssub.s32 %s21, 2
      %s28 = sadd.s32 %s21, 1
      %s29 = ssub.s32 %s21, %s28
      %p30 = scmp.eq.s32.totalorder %s29, 0
      %s32 = sadd.s32 %s31, 1
      %s33 = scalar_select %p30, %s31, %s32
      %p36 = pneg %p30
      %p37 = scmp.eq.s32.totalorder %s21, 1
      %p38 = por %p36, %p37
      %p39 = scmp.ne.s32.totalorder %s31, %s34
      %p40 = scmp.eq.s32.totalorder %s21, 0
      %p41 = por %p39, %p40
      %p42 = scmp.ne.s32.totalorder %s31, %s34
      %p43 = scmp.eq.s32.totalorder %s26, 1
      %p44 = por %p42, %p43
      %p45 = scmp.ne.s32.totalorder %s34, %s35
      %p46 = scmp.eq.s32.totalorder %s26, 0
      %p47 = por %p45, %p46
      %p48 = scmp.ne.s32.totalorder %s34, %s35
      %p49 = scmp.eq.s32.totalorder %s27, 1
      %p50 = por %p48, %p49
      %p52 = scmp.ne.s32.totalorder %s35, %s51
      %p53 = scmp.eq.s32.totalorder %s27, 0
      %p54 = por %p52, %p53
      %s56 = sadd.s32 %s55, 1
      %p59 = scmp.eq.s32.totalorder %s21, 1
      %p60 = scmp.ne.s32.totalorder %s55, %s57
      %p61 = scmp.eq.s32.totalorder %s21, 0
      %p62 = por %p60, %p61
      %p63 = scmp.ne.s32.totalorder %s55, %s57
      %p64 = scmp.eq.s32.totalorder %s26, 1
      %p65 = por %p63, %p64
      %p66 = scmp.ne.s32.totalorder %s57, %s58
      %p67 = scmp.eq.s32.totalorder %s26, 0
      %p68 = por %p66, %p67
      %p69 = scmp.ne.s32.totalorder %s57, %s58
      %p70 = scmp.eq.s32.totalorder %s27, 1
      %p71 = por %p69, %p70
      %p73 = scmp.ne.s32.totalorder %s58, %s72
      %p74 = scmp.eq.s32.totalorder %s27, 0
      %p75 = por %p73, %p74
      %s77 = sadd.s32 %s76, 1
      %p80 = scmp.eq.s32.totalorder %s21, 1
      %p81 = scmp.ne.s32.totalorder %s76, %s78
      %p82 = scmp.eq.s32.totalorder %s21, 0
      %p83 = por %p81, %p82
      %p84 = scmp.ne.s32.totalorder %s76, %s78
      %p85 = scmp.eq.s32.totalorder %s26, 1
      %p86 = por %p84, %p85
      %p87 = scmp.ne.s32.totalorder %s78, %s79
      %p88 = scmp.eq.s32.totalorder %s26, 0
      %p89 = por %p87, %p88
      %p90 = scmp.ne.s32.totalorder %s78, %s79
      %p91 = scmp.eq.s32.totalorder %s27, 1
      %p92 = por %p90, %p91
      %p94 = scmp.ne.s32.totalorder %s79, %s93
      %p95 = scmp.eq.s32.totalorder %s27, 0
      %p96 = por %p94, %p95
      %s98 = sadd.s32 %s97, 1
      %p101 = scmp.eq.s32.totalorder %s21, 1
      %p102 = scmp.ne.s32.totalorder %s97, %s99
      %p103 = scmp.eq.s32.totalorder %s21, 0
      %p104 = por %p102, %p103
      %p105 = scmp.ne.s32.totalorder %s97, %s99
      %p106 = scmp.eq.s32.totalorder %s26, 1
      %p107 = por %p105, %p106
      %p108 = scmp.ne.s32.totalorder %s99, %s100
      %p109 = scmp.eq.s32.totalorder %s26, 0
      %p110 = por %p108, %p109
      %p111 = scmp.ne.s32.totalorder %s99, %s100
      %p112 = scmp.eq.s32.totalorder %s27, 1
      %p113 = por %p111, %p112
      %p115 = scmp.ne.s32.totalorder %s100, %s114
      %p116 = scmp.eq.s32.totalorder %s27, 0
      %p117 = por %p115, %p116
      %s119 = sadd.s32 %s118, 1
      %p122 = scmp.eq.s32.totalorder %s21, 1
      %p123 = scmp.ne.s32.totalorder %s118, %s120
      %p124 = scmp.eq.s32.totalorder %s21, 0
      %p125 = por %p123, %p124
      %p126 = scmp.ne.s32.totalorder %s118, %s120
      %p127 = scmp.eq.s32.totalorder %s26, 1
      %p128 = por %p126, %p127
      %p129 = scmp.ne.s32.totalorder %s120, %s121
      %p130 = scmp.eq.s32.totalorder %s26, 0
      %p131 = por %p129, %p130
      %p132 = scmp.ne.s32.totalorder %s120, %s121
      %p133 = scmp.eq.s32.totalorder %s27, 1
      %p134 = por %p132, %p133
      %p136 = scmp.ne.s32.totalorder %s121, %s135
      %p137 = scmp.eq.s32.totalorder %s27, 0
      %p138 = por %p136, %p137
      %s140 = sadd.s32 %s139, 1
      %p143 = scmp.eq.s32.totalorder %s21, 1
      %p144 = scmp.ne.s32.totalorder %s139, %s141
      %p145 = scmp.eq.s32.totalorder %s21, 0
      %p146 = por %p144, %p145
      %p147 = scmp.ne.s32.totalorder %s139, %s141
      %p148 = scmp.eq.s32.totalorder %s26, 1
      %p149 = por %p147, %p148
      %p150 = scmp.ne.s32.totalorder %s141, %s142
      %p151 = scmp.eq.s32.totalorder %s26, 0
      %p152 = por %p150, %p151
      %p153 = scmp.ne.s32.totalorder %s141, %s142
      %p154 = scmp.eq.s32.totalorder %s27, 1
      %p155 = por %p153, %p154
      %p157 = scmp.ne.s32.totalorder %s142, %s156
      %p158 = scmp.eq.s32.totalorder %s27, 0
      %p159 = por %p157, %p158
      %s161 = sadd.s32 %s160, 1
      %p164 = scmp.eq.s32.totalorder %s21, 1
      %p165 = scmp.ne.s32.totalorder %s160, %s162
      %p166 = scmp.eq.s32.totalorder %s21, 0
      %p167 = por %p165, %p166
      %p168 = scmp.ne.s32.totalorder %s160, %s162
      %p169 = scmp.eq.s32.totalorder %s26, 1
      %p170 = por %p168, %p169
      %p171 = scmp.ne.s32.totalorder %s162, %s163
      %p172 = scmp.eq.s32.totalorder %s26, 0
      %p173 = por %p171, %p172
      %p174 = scmp.ne.s32.totalorder %s162, %s163
      %p175 = scmp.eq.s32.totalorder %s27, 1
      %p176 = por %p174, %p175
      %p178 = scmp.ne.s32.totalorder %s163, %s177
      %p179 = scmp.eq.s32.totalorder %s27, 0
      %p180 = por %p178, %p179
      %s181 = ssub.s32 %s21, %s28
      %p182 = scmp.eq.s32.totalorder %s181, 0
      %s184 = sadd.s32 %s183, 1
      %s185 = scalar_select %p182, %s183, %s184
      %p188 = pneg %p182
      %p189 = scmp.eq.s32.totalorder %s21, 1
      %p190 = por %p188, %p189
      %p191 = scmp.ne.s32.totalorder %s183, %s186
      %p192 = scmp.eq.s32.totalorder %s21, 0
      %p193 = por %p191, %p192
      %p194 = scmp.ne.s32.totalorder %s183, %s186
      %p195 = scmp.eq.s32.totalorder %s26, 1
      %p196 = por %p194, %p195
      %p197 = scmp.ne.s32.totalorder %s186, %s187
      %p198 = scmp.eq.s32.totalorder %s26, 0
      %p199 = por %p197, %p198
      %p200 = scmp.ne.s32.totalorder %s186, %s187
      %p201 = scmp.eq.s32.totalorder %s27, 1
      %p202 = por %p200, %p201
      %p204 = scmp.ne.s32.totalorder %s187, %s203
      %p205 = scmp.eq.s32.totalorder %s27, 0
      %p206 = por %p204, %p205
      %p207 = scmp.le.s32.totalorder 1, %s21
      %p208 = scmp.lt.s32.totalorder %s21, 3
      %p209 = pnand %p207, %p208
      %p210 = pneg %p209
      // Predicated region
      $region9: #{tpu_custom_call.1} parent=5 // pred_check
        _
      $region10: #{tpu_custom_call.1} parent=5 // pred_check_branch
        %212 = sbr.rel (%p209) target = $region12
      $region11: #{tpu_custom_call.1} parent=5 // pred_region
        %s213 = ssub.s32 %s21, 1
        // Predicated region
        $region13: #{tpu_custom_call.1} parent=11 // pred_check
          %p214 = pneg %p68
        $region14: #{tpu_custom_call.1} parent=11 // pred_check_branch
          %216 = sbr.rel (%p214) target = $region16
        $region15: #{tpu_custom_call.1} parent=11 // pred_region
          %s218 = ssub.s32 1536, 1536
          %219 = vsyncadd [#allocation8], %s218
          %s220 = sshll.u32 [#allocation7], 4
          %s221 = int_to_ptr.vmem [resolvable:$true] %s220
          %226 = dma.hbm_to_vmem [thread:$0]  %s1, 1536, %s221, [#allocation8], 64, 64, 4
        $region16: #{tpu_custom_call.1} parent=11 // pred_fallthru
          _
        // Predicated region
        $region17: #{tpu_custom_call.1} parent=11 // pred_check
          %p227 = pneg %p89
        $region18: #{tpu_custom_call.1} parent=11 // pred_check_branch
          %229 = sbr.rel (%p227) target = $region20
        $region19: #{tpu_custom_call.1} parent=11 // pred_region
          _
        $region20: #{tpu_custom_call.1} parent=11 // pred_fallthru
          _
        // Predicated region
        $region21: #{tpu_custom_call.1} parent=11 // pred_check
          %p230 = pneg %p110
        $region22: #{tpu_custom_call.1} parent=11 // pred_check_branch
          %232 = sbr.rel (%p230) target = $region24
        $region23: #{tpu_custom_call.1} parent=11 // pred_region
          %s234 = ssub.s32 1536, 1536
          %235 = vsyncadd [#allocation8], %s234
          %s236 = sshll.u32 [#allocation9], 4
          %s237 = int_to_ptr.vmem [resolvable:$true] %s236
          %242 = dma.hbm_to_vmem [thread:$0]  %s3, 1536, %s237, [#allocation8], 64, 64, 4
        $region24: #{tpu_custom_call.1} parent=11 // pred_fallthru
          _
        // Predicated region
        $region25: #{tpu_custom_call.1} parent=11 // pred_check
          %p243 = pneg %p131
        $region26: #{tpu_custom_call.1} parent=11 // pred_check_branch
          %245 = sbr.rel (%p243) target = $region28
        $region27: #{tpu_custom_call.1} parent=11 // pred_region
          _
        $region28: #{tpu_custom_call.1} parent=11 // pred_fallthru
          _
        // Predicated region
        $region29: #{tpu_custom_call.1} parent=11 // pred_check
          %p246 = pneg %p152
        $region30: #{tpu_custom_call.1} parent=11 // pred_check_branch
          %248 = sbr.rel (%p246) target = $region32
        $region31: #{tpu_custom_call.1} parent=11 // pred_region
          %s250 = ssub.s32 512, 512
          %251 = vsyncadd [#allocation11], %s250
          %s252 = sshll.u32 [#allocation10], 4
          %s253 = int_to_ptr.vmem [resolvable:$true] %s252
          %258 = dma.hbm_to_vmem [thread:$0]  %s5, 512, %s253, [#allocation11], 64, 64, 4
        $region32: #{tpu_custom_call.1} parent=11 // pred_fallthru
          _
        // Predicated region
        $region33: #{tpu_custom_call.1} parent=11 // pred_check
          %p259 = pneg %p173
        $region34: #{tpu_custom_call.1} parent=11 // pred_check_branch
          %261 = sbr.rel (%p259) target = $region36
        $region35: #{tpu_custom_call.1} parent=11 // pred_region
          _
        $region36: #{tpu_custom_call.1} parent=11 // pred_fallthru
          _
      $region12: #{tpu_custom_call.1} parent=5 // pred_fallthru
        _
      %p262 = scmp.lt.s32.totalorder %s21, 2
      // Predicated region
      $region37: #{tpu_custom_call.1} parent=5 // pred_check
        %p263 = pneg %p262
      $region38: #{tpu_custom_call.1} parent=5 // pred_check_branch
        %265 = sbr.rel (%p263) target = $region40
      $region39: #{tpu_custom_call.1} parent=5 // pred_region
        // Predicated region
        $region41: #{tpu_custom_call.1} parent=39 // pred_check
          %p266 = pneg %p41
        $region42: #{tpu_custom_call.1} parent=39 // pred_check_branch
          %268 = sbr.rel (%p266) target = $region44
        $region43: #{tpu_custom_call.1} parent=39 // pred_region
          %s269 = sand.u32 %s31, 1
          %s270 = scalar_lea.sflag [#allocation5], %s269
          %s271 = sand.u32 %s31, 1
          %s272 = smul.addr %s271, 16
          %s273 = scalar_lea.vmem [#allocation4], %s272
          %s275 = ssub.s32 256, 256
          %276 = vsyncadd %s270, %s275
          %s277 = smul.addr %s21, 2
          %s278 = smul.addr %s277, 128
          %s279 = scalar_lea.hbm %s0, %s278
          %s280 = sshll.u32 %s273, 4
          %s281 = int_to_ptr.vmem [resolvable:$true] %s280
          %286 = dma.hbm_to_vmem [thread:$0]  %s279, 256, %s281, %s270, 128, 128, 8
        $region44: #{tpu_custom_call.1} parent=39 // pred_fallthru
          _
      $region40: #{tpu_custom_call.1} parent=5 // pred_fallthru
        _
      %p287 = scmp.le.s32.totalorder 1, %s21
      %p288 = scmp.lt.s32.totalorder %s21, 3
      %p289 = pnand %p287, %p288
      %p290 = pneg %p289
      // Predicated region
      $region45: #{tpu_custom_call.1} parent=5 // pred_check
        _
      $region46: #{tpu_custom_call.1} parent=5 // pred_check_branch
        %292 = sbr.rel (%p289) target = $region48
      $region47: #{tpu_custom_call.1} parent=5 // pred_region
        %s293 = ssub.s32 %s21, 1
        %s294 = sand.u32 %s34, 1
        %s295 = scalar_lea.sflag [#allocation5], %s294
        %s296 = sand.u32 %s34, 1
        %s297 = smul.addr %s296, 16
        %s298 = scalar_lea.vmem [#allocation4], %s297
        // Predicated region
        $region49: #{tpu_custom_call.1} parent=47 // pred_check
          %p299 = pneg %p47
        $region50: #{tpu_custom_call.1} parent=47 // pred_check_branch
          %301 = sbr.rel (%p299) target = $region52
        $region51: #{tpu_custom_call.1} parent=47 // pred_region
          %302 = dma.done %s295, 256
        $region52: #{tpu_custom_call.1} parent=47 // pred_fallthru
          _
        // Predicated region
        $region53: #{tpu_custom_call.1} parent=47 // pred_check
          %p303 = pneg %p68
        $region54: #{tpu_custom_call.1} parent=47 // pred_check_branch
          %305 = sbr.rel (%p303) target = $region56
        $region55: #{tpu_custom_call.1} parent=47 // pred_region
          %306 = dma.done [#allocation8], 1536
        $region56: #{tpu_custom_call.1} parent=47 // pred_fallthru
          _
        // Predicated region
        $region57: #{tpu_custom_call.1} parent=47 // pred_check
          %p307 = pneg %p110
        $region58: #{tpu_custom_call.1} parent=47 // pred_check_branch
          %309 = sbr.rel (%p307) target = $region60
        $region59: #{tpu_custom_call.1} parent=47 // pred_region
          %310 = dma.done [#allocation8], 1536
        $region60: #{tpu_custom_call.1} parent=47 // pred_fallthru
          _
        // Predicated region
        $region61: #{tpu_custom_call.1} parent=47 // pred_check
          %p311 = pneg %p152
        $region62: #{tpu_custom_call.1} parent=47 // pred_check_branch
          %313 = sbr.rel (%p311) target = $region64
        $region63: #{tpu_custom_call.1} parent=47 // pred_region
          %314 = dma.done [#allocation11], 512
        $region64: #{tpu_custom_call.1} parent=47 // pred_fallthru
          _
        %s315 = sand.u32 %s34, 1
        %s316 = scalar_lea.sflag [#allocation5], %s315
        %s317 = sand.u32 %s34, 1
        %s318 = smul.addr %s317, 16
        %s319 = scalar_lea.vmem [#allocation4], %s318
        %p320 = pneg %p47
        %p321 = pneg %p44
        %p322 = pneg %p68
        %p323 = pneg %p65
        %p324 = pneg %p89
        %p325 = pneg %p86
        %p326 = pneg %p110
        %p327 = pneg %p107
        %p328 = pneg %p131
        %p329 = pneg %p128
        %p330 = pneg %p152
        %p331 = pneg %p149
        %p332 = pneg %p173
        %p333 = pneg %p170
        %p334 = pneg %p199
        %p335 = pneg %p196
        %s336 = sand.u32 %s186, 1
        %s337 = scalar_lea.sflag [#allocation6], %s336
        %s338 = sand.u32 %s186, 1
        %s339 = smul.addr %s338, 8
        %s340 = scalar_lea.vmem [#allocation12], %s339
        %v342 = vld [vmem:[%s298] sm:$0xff]
        %v343 = vld [vmem:[%s298 + $0x8] sm:$0xff]
        %vm344 = vcmask 516096
        %345 = vst.msk [vmem:[#allocation2 + $0x7] sm:$0x1] %vm344, 0.0
        %346 = vst.msk [vmem:[#allocation2 + $0x18] sm:$0x1] %vm344, 0.0
        %vm347 = vcmask 523264
        %348 = vst.msk [vmem:[#allocation2 + $0x8] sm:$0xff] %vm347, %v342
        %349 = vst.msk [vmem:[#allocation2 + $0x10] sm:$0xff] %vm347, %v343
        %v350 = vld [vmem:[%s2] sm:$0x1]
        %s351 = scalar_lea.vmem [#allocation2], 7
        %v352 = vld [vmem:[%s351] ss:$2 sm:$0xff]
        %v353 = vpack.c.bf16 %v352, %v352
        %v354 = vld [vmem:[#allocation7] sm:$0xf]
        %v355 = vld [vmem:[#allocation7 + $0x4] sm:$0xf]
        %v356 = vld [vmem:[#allocation7 + $0x8] sm:$0xf]
        %v357 = vld [vmem:[#allocation7 + $0xc] sm:$0xf]
        %v358 = vld [vmem:[#allocation7 + $0x10] sm:$0xf]
        %v359 = vld [vmem:[#allocation7 + $0x14] sm:$0xf]
        %v360 = vld [vmem:[#allocation7 + $0x18] sm:$0xf]
        %v361 = vld [vmem:[#allocation7 + $0x1c] sm:$0xf]
        %v370 = vunpack.c.l.b16 %v354
        %v371 = vunpack.c.l.b16 %v355
        %v372 = vunpack.c.l.b16 %v356
        %v373 = vunpack.c.l.b16 %v357
        %v374 = vunpack.c.l.b16 %v358
        %v375 = vunpack.c.l.b16 %v359
        %v376 = vunpack.c.l.b16 %v360
        %v377 = vunpack.c.l.b16 %v361
        %v378 = vpack.c.b16 %v371, %v370
        %v379 = vpack.c.b16 %v373, %v372
        %v380 = vpack.c.b16 %v375, %v374
        %v381 = vpack.c.b16 %v377, %v376
        %v387 = vsel %vm347, %v353, 0
        %389 = vmatprep.subr.bf16.mxu0 0
        %390 = vmatpush1.bf16.msra.mxu0 %v378
        %391 = vmatprep.subr.bf16.mxu0 0
        %392 = vmatpush1.bf16.msra.mxu0 %v379
        %393 = vmatprep.subr.bf16.mxu0 0
        %394 = vmatpush1.bf16.msra.mxu0 %v380
        %395 = vmatprep.subr.bf16.mxu0 0
        %396 = vmatpush1.bf16.msra.mxu0 %v381
        %397 = vmatprep.subr.bf16.mxu0 0
        %398 = vmatpush1.bf16.msra.mxu0 0
        %399 = vmatprep.subr.bf16.mxu0 0
        %400 = vmatpush1.bf16.msra.mxu0 0
        %401 = vmatprep.subr.bf16.mxu0 0
        %402 = vmatpush1.bf16.msra.mxu0 0
        %403 = vmatprep.subr.bf16.mxu0 0
        %404 = vmatpush1.bf16.msra.mxu0 0
        %405 = vmatprep.subr.bf16.mxu0 0
        %406 = vmatpush1.bf16.msra.mxu0 0
        %407 = vmatprep.subr.bf16.mxu0 0
        %408 = vmatpush1.bf16.msra.mxu0 0
        %409 = vmatprep.subr.bf16.mxu0 0
        %410 = vmatpush1.bf16.msra.mxu0 0
        %411 = vmatprep.subr.bf16.mxu0 0
        %412 = vmatpush1.bf16.msra.mxu0 0
        %413 = vmatprep.subr.bf16.mxu0 0
        %414 = vmatpush1.bf16.msra.mxu0 0
        %415 = vmatprep.subr.bf16.mxu0 0
        %416 = vmatpush1.bf16.msra.mxu0 0
        %417 = vmatprep.subr.bf16.mxu0 0
        %418 = vmatpush1.bf16.msra.mxu0 0
        %419 = vmatprep.subr.bf16.mxu0 0
        %420 = vmatpush1.bf16.msra.mxu0 0
        %421 = vmatprep.mubr.bf16.mxu0 0
        %422 = vmatmul.mubr.bf16.gmra.mrb[0].mxu0 %v387
        %v423 = vpop.f32.mrb[0].mxu0
        %v424 = vadd.f32 0.0, %v423
        %v425 = vpop.f32.mrb[0].mxu0
        %v426 = vpop.f32.mrb[0].mxu0
        %v427 = vpop.f32.mrb[0].mxu0
        %428 = vdwg.mxu0
        %v430 = vlaneseq
        %v431 = vshrl.u32 %v430, 7
        %v432 = vsub.s32 0, %v431
        %v433 = vrot.slane %v350, %v432
        %v435 = vadd.f32 %v433, %v424
        %s436 = scalar_lea.vmem [#allocation2], 8
        %v437 = vld [vmem:[%s436] ss:$2 sm:$0xff]
        %v438 = vpack.c.bf16 %v437, %v437
        %s439 = scalar_lea.vmem [#allocation7], 32
        %v440 = vld [vmem:[%s439] sm:$0xf]
        %v441 = vld [vmem:[%s439 + $0x4] sm:$0xf]
        %v442 = vld [vmem:[%s439 + $0x8] sm:$0xf]
        %v443 = vld [vmem:[%s439 + $0xc] sm:$0xf]
        %v444 = vld [vmem:[%s439 + $0x10] sm:$0xf]
        %v445 = vld [vmem:[%s439 + $0x14] sm:$0xf]
        %v446 = vld [vmem:[%s439 + $0x18] sm:$0xf]
        %v447 = vld [vmem:[%s439 + $0x1c] sm:$0xf]
        %v456 = vunpack.c.l.b16 %v440
        %v457 = vunpack.c.l.b16 %v441
        %v458 = vunpack.c.l.b16 %v442
        %v459 = vunpack.c.l.b16 %v443
        %v460 = vunpack.c.l.b16 %v444
        %v461 = vunpack.c.l.b16 %v445
        %v462 = vunpack.c.l.b16 %v446
        %v463 = vunpack.c.l.b16 %v447
        %v464 = vpack.c.b16 %v457, %v456
        %v465 = vpack.c.b16 %v459, %v458
        %v466 = vpack.c.b16 %v461, %v460
        %v467 = vpack.c.b16 %v463, %v462
        %v473 = vsel %vm347, %v438, 0
        %475 = vmatprep.subr.bf16.mxu0 0
        %476 = vmatpush1.bf16.msra.mxu0 %v464
        %477 = vmatprep.subr.bf16.mxu0 0
        %478 = vmatpush1.bf16.msra.mxu0 %v465
        %479 = vmatprep.subr.bf16.mxu0 0
        %480 = vmatpush1.bf16.msra.mxu0 %v466
        %481 = vmatprep.subr.bf16.mxu0 0
        %482 = vmatpush1.bf16.msra.mxu0 %v467
        %483 = vmatprep.subr.bf16.mxu0 0
        %484 = vmatpush1.bf16.msra.mxu0 0
        %485 = vmatprep.subr.bf16.mxu0 0
        %486 = vmatpush1.bf16.msra.mxu0 0
        %487 = vmatprep.subr.bf16.mxu0 0
        %488 = vmatpush1.bf16.msra.mxu0 0
        %489 = vmatprep.subr.bf16.mxu0 0
        %490 = vmatpush1.bf16.msra.mxu0 0
        %491 = vmatprep.subr.bf16.mxu0 0
        %492 = vmatpush1.bf16.msra.mxu0 0
        %493 = vmatprep.subr.bf16.mxu0 0
        %494 = vmatpush1.bf16.msra.mxu0 0
        %495 = vmatprep.subr.bf16.mxu0 0
        %496 = vmatpush1.bf16.msra.mxu0 0
        %497 = vmatprep.subr.bf16.mxu0 0
        %498 = vmatpush1.bf16.msra.mxu0 0
        %499 = vmatprep.subr.bf16.mxu0 0
        %500 = vmatpush1.bf16.msra.mxu0 0
        %501 = vmatprep.subr.bf16.mxu0 0
        %502 = vmatpush1.bf16.msra.mxu0 0
        %503 = vmatprep.subr.bf16.mxu0 0
        %504 = vmatpush1.bf16.msra.mxu0 0
        %505 = vmatprep.subr.bf16.mxu0 0
        %506 = vmatpush1.bf16.msra.mxu0 0
        %507 = vmatprep.mubr.bf16.mxu0 0
        %508 = vmatmul.mubr.bf16.gmra.mrb[0].mxu0 %v473
        %v509 = vpop.f32.mrb[0].mxu0
        %v510 = vadd.f32 0.0, %v509
        %v511 = vpop.f32.mrb[0].mxu0
        %v512 = vpop.f32.mrb[0].mxu0
        %v513 = vpop.f32.mrb[0].mxu0
        %514 = vdwg.mxu0
        %v515 = vadd.f32 %v435, %v510
        %s516 = scalar_lea.vmem [#allocation2], 9
        %v517 = vld [vmem:[%s516] ss:$2 sm:$0xff]
        %v518 = vpack.c.bf16 %v517, %v517
        %s519 = scalar_lea.vmem [#allocation7], 64
        %v520 = vld [vmem:[%s519] sm:$0xf]
        %v521 = vld [vmem:[%s519 + $0x4] sm:$0xf]
        %v522 = vld [vmem:[%s519 + $0x8] sm:$0xf]
        %v523 = vld [vmem:[%s519 + $0xc] sm:$0xf]
        %v524 = vld [vmem:[%s519 + $0x10] sm:$0xf]
        %v525 = vld [vmem:[%s519 + $0x14] sm:$0xf]
        %v526 = vld [vmem:[%s519 + $0x18] sm:$0xf]
        %v527 = vld [vmem:[%s519 + $0x1c] sm:$0xf]
        %v536 = vunpack.c.l.b16 %v520
        %v537 = vunpack.c.l.b16 %v521
        %v538 = vunpack.c.l.b16 %v522
        %v539 = vunpack.c.l.b16 %v523
        %v540 = vunpack.c.l.b16 %v524
        %v541 = vunpack.c.l.b16 %v525
        %v542 = vunpack.c.l.b16 %v526
        %v543 = vunpack.c.l.b16 %v527
        %v544 = vpack.c.b16 %v537, %v536
        %v545 = vpack.c.b16 %v539, %v538
        %v546 = vpack.c.b16 %v541, %v540
        %v547 = vpack.c.b16 %v543, %v542
        %v553 = vsel %vm347, %v518, 0
        %555 = vmatprep.subr.bf16.mxu0 0
        %556 = vmatpush1.bf16.msra.mxu0 %v544
        %557 = vmatprep.subr.bf16.mxu0 0
        %558 = vmatpush1.bf16.msra.mxu0 %v545
        %559 = vmatprep.subr.bf16.mxu0 0
        %560 = vmatpush1.bf16.msra.mxu0 %v546
        %561 = vmatprep.subr.bf16.mxu0 0
        %562 = vmatpush1.bf16.msra.mxu0 %v547
        %563 = vmatprep.subr.bf16.mxu0 0
        %564 = vmatpush1.bf16.msra.mxu0 0
        %565 = vmatprep.subr.bf16.mxu0 0
        %566 = vmatpush1.bf16.msra.mxu0 0
        %567 = vmatprep.subr.bf16.mxu0 0
        %568 = vmatpush1.bf16.msra.mxu0 0
        %569 = vmatprep.subr.bf16.mxu0 0
        %570 = vmatpush1.bf16.msra.mxu0 0
        %571 = vmatprep.subr.bf16.mxu0 0
        %572 = vmatpush1.bf16.msra.mxu0 0
        %573 = vmatprep.subr.bf16.mxu0 0
        %574 = vmatpush1.bf16.msra.mxu0 0
        %575 = vmatprep.subr.bf16.mxu0 0
        %576 = vmatpush1.bf16.msra.mxu0 0
        %577 = vmatprep.subr.bf16.mxu0 0
        %578 = vmatpush1.bf16.msra.mxu0 0
        %579 = vmatprep.subr.bf16.mxu0 0
        %580 = vmatpush1.bf16.msra.mxu0 0
        %581 = vmatprep.subr.bf16.mxu0 0
        %582 = vmatpush1.bf16.msra.mxu0 0
        %583 = vmatprep.subr.bf16.mxu0 0
        %584 = vmatpush1.bf16.msra.mxu0 0
        %585 = vmatprep.subr.bf16.mxu0 0
        %586 = vmatpush1.bf16.msra.mxu0 0
        %587 = vmatprep.mubr.bf16.mxu0 0
        %588 = vmatmul.mubr.bf16.gmra.mrb[0].mxu0 %v553
        %v589 = vpop.f32.mrb[0].mxu0
        %v590 = vadd.f32 0.0, %v589
        %v591 = vpop.f32.mrb[0].mxu0
        %v592 = vpop.f32.mrb[0].mxu0
        %v593 = vpop.f32.mrb[0].mxu0
        %594 = vdwg.mxu0
        %v595 = vadd.f32 %v515, %v590
        %v596 = vmax.f32 %v595, 0.0
        %597 = vst.msk [vmem:[#allocation3 + $0x7] sm:$0x1] %vm344, 0.0
        %598 = vst.msk [vmem:[#allocation3 + $0x10] sm:$0x1] %vm344, 0.0
        %599 = vst.msk [vmem:[#allocation3 + $0x8] sm:$0xff] %vm347, %v596
        %v600 = vld [vmem:[%s4] sm:$0x1]
        %v601 = vld [vmem:[#allocation3 + $0x7] sm:$0xff]
        %v602 = vpack.c.bf16 %v601, %v601
        %v603 = vld [vmem:[#allocation9] sm:$0xf]
        %v604 = vld [vmem:[#allocation9 + $0x4] sm:$0xf]
        %v605 = vld [vmem:[#allocation9 + $0x8] sm:$0xf]
        %v606 = vld [vmem:[#allocation9 + $0xc] sm:$0xf]
        %v607 = vld [vmem:[#allocation9 + $0x10] sm:$0xf]
        %v608 = vld [vmem:[#allocation9 + $0x14] sm:$0xf]
        %v609 = vld [vmem:[#allocation9 + $0x18] sm:$0xf]
        %v610 = vld [vmem:[#allocation9 + $0x1c] sm:$0xf]
        %v619 = vunpack.c.l.b16 %v603
        %v620 = vunpack.c.l.b16 %v604
        %v621 = vunpack.c.l.b16 %v605
        %v622 = vunpack.c.l.b16 %v606
        %v623 = vunpack.c.l.b16 %v607
        %v624 = vunpack.c.l.b16 %v608
        %v625 = vunpack.c.l.b16 %v609
        %v626 = vunpack.c.l.b16 %v610
        %v627 = vpack.c.b16 %v620, %v619
        %v628 = vpack.c.b16 %v622, %v621
        %v629 = vpack.c.b16 %v624, %v623
        %v630 = vpack.c.b16 %v626, %v625
        %v636 = vsel %vm347, %v602, 0
        %638 = vmatprep.subr.bf16.mxu0 0
        %639 = vmatpush1.bf16.msra.mxu0 %v627
        %640 = vmatprep.subr.bf16.mxu0 0
        %641 = vmatpush1.bf16.msra.mxu0 %v628
        %642 = vmatprep.subr.bf16.mxu0 0
        %643 = vmatpush1.bf16.msra.mxu0 %v629
        %644 = vmatprep.subr.bf16.mxu0 0
        %645 = vmatpush1.bf16.msra.mxu0 %v630
        %646 = vmatprep.subr.bf16.mxu0 0
        %647 = vmatpush1.bf16.msra.mxu0 0
        %648 = vmatprep.subr.bf16.mxu0 0
        %649 = vmatpush1.bf16.msra.mxu0 0
        %650 = vmatprep.subr.bf16.mxu0 0
        %651 = vmatpush1.bf16.msra.mxu0 0
        %652 = vmatprep.subr.bf16.mxu0 0
        %653 = vmatpush1.bf16.msra.mxu0 0
        %654 = vmatprep.subr.bf16.mxu0 0
        %655 = vmatpush1.bf16.msra.mxu0 0
        %656 = vmatprep.subr.bf16.mxu0 0
        %657 = vmatpush1.bf16.msra.mxu0 0
        %658 = vmatprep.subr.bf16.mxu0 0
        %659 = vmatpush1.bf16.msra.mxu0 0
        %660 = vmatprep.subr.bf16.mxu0 0
        %661 = vmatpush1.bf16.msra.mxu0 0
        %662 = vmatprep.subr.bf16.mxu0 0
        %663 = vmatpush1.bf16.msra.mxu0 0
        %664 = vmatprep.subr.bf16.mxu0 0
        %665 = vmatpush1.bf16.msra.mxu0 0
        %666 = vmatprep.subr.bf16.mxu0 0
        %667 = vmatpush1.bf16.msra.mxu0 0
        %668 = vmatprep.subr.bf16.mxu0 0
        %669 = vmatpush1.bf16.msra.mxu0 0
        %670 = vmatprep.mubr.bf16.mxu0 0
        %671 = vmatmul.mubr.bf16.gmra.mrb[0].mxu0 %v636
        %v672 = vpop.f32.mrb[0].mxu0
        %v673 = vadd.f32 0.0, %v672
        %v674 = vpop.f32.mrb[0].mxu0
        %v675 = vpop.f32.mrb[0].mxu0
        %v676 = vpop.f32.mrb[0].mxu0
        %677 = vdwg.mxu0
        %v679 = vlaneseq
        %v680 = vshrl.u32 %v679, 7
        %v681 = vsub.s32 0, %v680
        %v682 = vrot.slane %v600, %v681
        %v684 = vadd.f32 %v682, %v673
        %v685 = vld [vmem:[#allocation3 + $0x8] sm:$0xff]
        %v686 = vpack.c.bf16 %v685, %v685
        %s687 = scalar_lea.vmem [#allocation9], 32
        %v688 = vld [vmem:[%s687] sm:$0xf]
        %v689 = vld [vmem:[%s687 + $0x4] sm:$0xf]
        %v690 = vld [vmem:[%s687 + $0x8] sm:$0xf]
        %v691 = vld [vmem:[%s687 + $0xc] sm:$0xf]
        %v692 = vld [vmem:[%s687 + $0x10] sm:$0xf]
        %v693 = vld [vmem:[%s687 + $0x14] sm:$0xf]
        %v694 = vld [vmem:[%s687 + $0x18] sm:$0xf]
        %v695 = vld [vmem:[%s687 + $0x1c] sm:$0xf]
        %v704 = vunpack.c.l.b16 %v688
        %v705 = vunpack.c.l.b16 %v689
        %v706 = vunpack.c.l.b16 %v690
        %v707 = vunpack.c.l.b16 %v691
        %v708 = vunpack.c.l.b16 %v692
        %v709 = vunpack.c.l.b16 %v693
        %v710 = vunpack.c.l.b16 %v694
        %v711 = vunpack.c.l.b16 %v695
        %v712 = vpack.c.b16 %v705, %v704
        %v713 = vpack.c.b16 %v707, %v706
        %v714 = vpack.c.b16 %v709, %v708
        %v715 = vpack.c.b16 %v711, %v710
        %v721 = vsel %vm347, %v686, 0
        %723 = vmatprep.subr.bf16.mxu0 0
        %724 = vmatpush1.bf16.msra.mxu0 %v712
        %725 = vmatprep.subr.bf16.mxu0 0
        %726 = vmatpush1.bf16.msra.mxu0 %v713
        %727 = vmatprep.subr.bf16.mxu0 0
        %728 = vmatpush1.bf16.msra.mxu0 %v714
        %729 = vmatprep.subr.bf16.mxu0 0
        %730 = vmatpush1.bf16.msra.mxu0 %v715
        %731 = vmatprep.subr.bf16.mxu0 0
        %732 = vmatpush1.bf16.msra.mxu0 0
        %733 = vmatprep.subr.bf16.mxu0 0
        %734 = vmatpush1.bf16.msra.mxu0 0
        %735 = vmatprep.subr.bf16.mxu0 0
        %736 = vmatpush1.bf16.msra.mxu0 0
        %737 = vmatprep.subr.bf16.mxu0 0
        %738 = vmatpush1.bf16.msra.mxu0 0
        %739 = vmatprep.subr.bf16.mxu0 0
        %740 = vmatpush1.bf16.msra.mxu0 0
        %741 = vmatprep.subr.bf16.mxu0 0
        %742 = vmatpush1.bf16.msra.mxu0 0
        %743 = vmatprep.subr.bf16.mxu0 0
        %744 = vmatpush1.bf16.msra.mxu0 0
        %745 = vmatprep.subr.bf16.mxu0 0
        %746 = vmatpush1.bf16.msra.mxu0 0
        %747 = vmatprep.subr.bf16.mxu0 0
        %748 = vmatpush1.bf16.msra.mxu0 0
        %749 = vmatprep.subr.bf16.mxu0 0
        %750 = vmatpush1.bf16.msra.mxu0 0
        %751 = vmatprep.subr.bf16.mxu0 0
        %752 = vmatpush1.bf16.msra.mxu0 0
        %753 = vmatprep.subr.bf16.mxu0 0
        %754 = vmatpush1.bf16.msra.mxu0 0
        %755 = vmatprep.mubr.bf16.mxu0 0
        %756 = vmatmul.mubr.bf16.gmra.mrb[0].mxu0 %v721
        %v757 = vpop.f32.mrb[0].mxu0
        %v758 = vadd.f32 0.0, %v757
        %v759 = vpop.f32.mrb[0].mxu0
        %v760 = vpop.f32.mrb[0].mxu0
        %v761 = vpop.f32.mrb[0].mxu0
        %762 = vdwg.mxu0
        %v763 = vadd.f32 %v684, %v758
        %v764 = vld [vmem:[#allocation3 + $0x9] sm:$0xff]
        %v765 = vpack.c.bf16 %v764, %v764
        %s766 = scalar_lea.vmem [#allocation9], 64
        %v767 = vld [vmem:[%s766] sm:$0xf]
        %v768 = vld [vmem:[%s766 + $0x4] sm:$0xf]
        %v769 = vld [vmem:[%s766 + $0x8] sm:$0xf]
        %v770 = vld [vmem:[%s766 + $0xc] sm:$0xf]
        %v771 = vld [vmem:[%s766 + $0x10] sm:$0xf]
        %v772 = vld [vmem:[%s766 + $0x14] sm:$0xf]
        %v773 = vld [vmem:[%s766 + $0x18] sm:$0xf]
        %v774 = vld [vmem:[%s766 + $0x1c] sm:$0xf]
        %v783 = vunpack.c.l.b16 %v767
        %v784 = vunpack.c.l.b16 %v768
        %v785 = vunpack.c.l.b16 %v769
        %v786 = vunpack.c.l.b16 %v770
        %v787 = vunpack.c.l.b16 %v771
        %v788 = vunpack.c.l.b16 %v772
        %v789 = vunpack.c.l.b16 %v773
        %v790 = vunpack.c.l.b16 %v774
        %v791 = vpack.c.b16 %v784, %v783
        %v792 = vpack.c.b16 %v786, %v785
        %v793 = vpack.c.b16 %v788, %v787
        %v794 = vpack.c.b16 %v790, %v789
        %v800 = vsel %vm347, %v765, 0
        %802 = vmatprep.subr.bf16.mxu0 0
        %803 = vmatpush1.bf16.msra.mxu0 %v791
        %804 = vmatprep.subr.bf16.mxu0 0
        %805 = vmatpush1.bf16.msra.mxu0 %v792
        %806 = vmatprep.subr.bf16.mxu0 0
        %807 = vmatpush1.bf16.msra.mxu0 %v793
        %808 = vmatprep.subr.bf16.mxu0 0
        %809 = vmatpush1.bf16.msra.mxu0 %v794
        %810 = vmatprep.subr.bf16.mxu0 0
        %811 = vmatpush1.bf16.msra.mxu0 0
        %812 = vmatprep.subr.bf16.mxu0 0
        %813 = vmatpush1.bf16.msra.mxu0 0
        %814 = vmatprep.subr.bf16.mxu0 0
        %815 = vmatpush1.bf16.msra.mxu0 0
        %816 = vmatprep.subr.bf16.mxu0 0
        %817 = vmatpush1.bf16.msra.mxu0 0
        %818 = vmatprep.subr.bf16.mxu0 0
        %819 = vmatpush1.bf16.msra.mxu0 0
        %820 = vmatprep.subr.bf16.mxu0 0
        %821 = vmatpush1.bf16.msra.mxu0 0
        %822 = vmatprep.subr.bf16.mxu0 0
        %823 = vmatpush1.bf16.msra.mxu0 0
        %824 = vmatprep.subr.bf16.mxu0 0
        %825 = vmatpush1.bf16.msra.mxu0 0
        %826 = vmatprep.subr.bf16.mxu0 0
        %827 = vmatpush1.bf16.msra.mxu0 0
        %828 = vmatprep.subr.bf16.mxu0 0
        %829 = vmatpush1.bf16.msra.mxu0 0
        %830 = vmatprep.subr.bf16.mxu0 0
        %831 = vmatpush1.bf16.msra.mxu0 0
        %832 = vmatprep.subr.bf16.mxu0 0
        %833 = vmatpush1.bf16.msra.mxu0 0
        %834 = vmatprep.mubr.bf16.mxu0 0
        %835 = vmatmul.mubr.bf16.gmra.mrb[0].mxu0 %v800
        %v836 = vpop.f32.mrb[0].mxu0
        %v837 = vadd.f32 0.0, %v836
        %v838 = vpop.f32.mrb[0].mxu0
        %v839 = vpop.f32.mrb[0].mxu0
        %v840 = vpop.f32.mrb[0].mxu0
        %841 = vdwg.mxu0
        %v842 = vadd.f32 %v763, %v837
        %v843 = vld [vmem:[%s436] ss:$2 sm:$0xff]
        %v844 = vpack.c.bf16 %v843, %v843
        %v845 = vld [vmem:[#allocation10] sm:$0xf]
        %v846 = vld [vmem:[#allocation10 + $0x4] sm:$0xf]
        %v847 = vld [vmem:[#allocation10 + $0x8] sm:$0xf]
        %v848 = vld [vmem:[#allocation10 + $0xc] sm:$0xf]
        %v849 = vld [vmem:[#allocation10 + $0x10] sm:$0xf]
        %v850 = vld [vmem:[#allocation10 + $0x14] sm:$0xf]
        %v851 = vld [vmem:[#allocation10 + $0x18] sm:$0xf]
        %v852 = vld [vmem:[#allocation10 + $0x1c] sm:$0xf]
        %v853 = vld [vmem:[%s6] sm:$0x1]
        %v855 = vlaneseq
        %v856 = vshrl.u32 %v855, 7
        %v857 = vsub.s32 0, %v856
        %v858 = vrot.slane %v853, %v857
        %v868 = vunpack.c.l.b16 %v845
        %v869 = vunpack.c.l.b16 %v846
        %v870 = vunpack.c.l.b16 %v847
        %v871 = vunpack.c.l.b16 %v848
        %v872 = vunpack.c.l.b16 %v849
        %v873 = vunpack.c.l.b16 %v850
        %v874 = vunpack.c.l.b16 %v851
        %v875 = vunpack.c.l.b16 %v852
        %v876 = vpack.c.b16 %v869, %v868
        %v877 = vpack.c.b16 %v871, %v870
        %v878 = vpack.c.b16 %v873, %v872
        %v879 = vpack.c.b16 %v875, %v874
        %v885 = vsel %vm347, %v844, 0
        %887 = vmatprep.subr.bf16.mxu0 0
        %888 = vmatpush1.bf16.msra.mxu0 %v876
        %889 = vmatprep.subr.bf16.mxu0 0
        %890 = vmatpush1.bf16.msra.mxu0 %v877
        %891 = vmatprep.subr.bf16.mxu0 0
        %892 = vmatpush1.bf16.msra.mxu0 %v878
        %893 = vmatprep.subr.bf16.mxu0 0
        %894 = vmatpush1.bf16.msra.mxu0 %v879
        %895 = vmatprep.subr.bf16.mxu0 0
        %896 = vmatpush1.bf16.msra.mxu0 0
        %897 = vmatprep.subr.bf16.mxu0 0
        %898 = vmatpush1.bf16.msra.mxu0 0
        %899 = vmatprep.subr.bf16.mxu0 0
        %900 = vmatpush1.bf16.msra.mxu0 0
        %901 = vmatprep.subr.bf16.mxu0 0
        %902 = vmatpush1.bf16.msra.mxu0 0
        %903 = vmatprep.subr.bf16.mxu0 0
        %904 = vmatpush1.bf16.msra.mxu0 0
        %905 = vmatprep.subr.bf16.mxu0 0
        %906 = vmatpush1.bf16.msra.mxu0 0
        %907 = vmatprep.subr.bf16.mxu0 0
        %908 = vmatpush1.bf16.msra.mxu0 0
        %909 = vmatprep.subr.bf16.mxu0 0
        %910 = vmatpush1.bf16.msra.mxu0 0
        %911 = vmatprep.subr.bf16.mxu0 0
        %912 = vmatpush1.bf16.msra.mxu0 0
        %913 = vmatprep.subr.bf16.mxu0 0
        %914 = vmatpush1.bf16.msra.mxu0 0
        %915 = vmatprep.subr.bf16.mxu0 0
        %916 = vmatpush1.bf16.msra.mxu0 0
        %917 = vmatprep.subr.bf16.mxu0 0
        %918 = vmatpush1.bf16.msra.mxu0 0
        %919 = vmatprep.mubr.bf16.mxu0 0
        %920 = vmatmul.mubr.bf16.gmra.mrb[0].mxu0 %v885
        %v921 = vpop.f32.mrb[0].mxu0
        %v922 = vadd.f32 %v858, %v921
        %v923 = vpop.f32.mrb[0].mxu0
        %v924 = vpop.f32.mrb[0].mxu0
        %v925 = vpop.f32.mrb[0].mxu0
        %926 = vdwg.mxu0
        %v927 = vadd.f32 %v842, %v922
        %v928 = vmax.f32 %v927, 0.0
        %929 = vst.msk [vmem:[%s340] sm:$0xff] %vm347, %v928
        %s930 = sand.u32 %s186, 1
        %s931 = scalar_lea.sflag [#allocation6], %s930
        %s932 = sand.u32 %s186, 1
        %s933 = smul.addr %s932, 8
        %s934 = scalar_lea.vmem [#allocation12], %s933
        // Predicated region
        $region65: #{tpu_custom_call.1} parent=47 // pred_check
          %p935 = pneg %p196
        $region66: #{tpu_custom_call.1} parent=47 // pred_check_branch
          %937 = sbr.rel (%p935) target = $region68
        $region67: #{tpu_custom_call.1} parent=47 // pred_region
          %s939 = ssub.s32 128, 128
          %940 = vsyncadd %s931, %s939
          %s941 = smul.addr %s26, 128
          %s942 = scalar_lea.hbm %s7, %s941
          %s944 = sshll.u32 %s934, 4
          %s945 = int_to_ptr.vmem [resolvable:$true] %s944
          %947 = dma.vmem_to_hbm [thread:$0]  %s945, 128, %s942, %s931
        $region68: #{tpu_custom_call.1} parent=47 // pred_fallthru
          _
      $region48: #{tpu_custom_call.1} parent=5 // pred_fallthru
        _
      %p948 = scmp.le.s32.totalorder 2, %s21
      // Predicated region
      $region69: #{tpu_custom_call.1} parent=5 // pred_check
        %p949 = pneg %p948
      $region70: #{tpu_custom_call.1} parent=5 // pred_check_branch
        %951 = sbr.rel (%p949) target = $region72
      $region71: #{tpu_custom_call.1} parent=5 // pred_region
        %s952 = ssub.s32 %s21, 2
        // Predicated region
        $region73: #{tpu_custom_call.1} parent=71 // pred_check
          %p953 = pneg %p202
        $region74: #{tpu_custom_call.1} parent=71 // pred_check_branch
          %955 = sbr.rel (%p953) target = $region76
        $region75: #{tpu_custom_call.1} parent=71 // pred_region
          %s956 = sand.u32 %s187, 1
          %s957 = scalar_lea.sflag [#allocation6], %s956
          %s958 = sand.u32 %s187, 1
          %s959 = smul.addr %s958, 8
          %s960 = scalar_lea.vmem [#allocation12], %s959
          %961 = dma.done %s957, 128
        $region76: #{tpu_custom_call.1} parent=71 // pred_fallthru
          _
      $region72: #{tpu_custom_call.1} parent=5 // pred_fallthru
        _
    $region6: #{tpu_custom_call.1} parent=1 // loop_footer
      %s25 = sadd.s32 1, %s21
    $region7: #{tpu_custom_call.1} parent=1 // loop_footer_branch
      %20 = sbr.rel target = $region3
    $region8: #{tpu_custom_call.1} parent=1 // loop_exit
      _
    %962 = vsyncpa [#allocation5], 1
    %s963 = scalar_lea.sflag [#allocation5], 1
    %964 = vsyncpa %s963, 1
    %965 = vsyncpa [#allocation8], 1
    %966 = vsyncpa [#allocation11], 1
    %967 = vsyncpa [#allocation6], 1
    %s968 = scalar_lea.sflag [#allocation6], 1
    %969 = vsyncpa %s968, 1

</llo_original>
